<compile_context>
chip_gen: v7x
topology: tpu7x:2x2x1
jax: 0.10.0
libtpu: 0.0.40
codegen_flags: <defaults>
</compile_context>

<pallas_src>
import jax
import jax.numpy as jnp
from jax import lax
from jax.experimental import pallas as pl
from jax.experimental.pallas import tpu as pltpu

EPS = 1e-3


def _adaptive_norm_kernel(w0_ref, w1_ref, gamma_ref, beta_ref, x_ref, o_ref):
    # x_ref / o_ref: (N, Cblk, HW) f32 VMEM tiles.
    # gamma_ref / beta_ref: (Cblk, 1) f32 VMEM.  w0_ref / w1_ref: (1,) SMEM.
    n = x_ref.shape[0]
    cblk = x_ref.shape[1]
    hw = x_ref.shape[2]
    inv_count = 1.0 / (n * hw)

    # ---- Pass 1: per-channel mean (reduce over batch + spatial), accumulated
    # one batch slice at a time so temporaries stay (Cblk, HW).
    def sum_body(i, acc):
        return acc + jnp.sum(x_ref[i], axis=1, keepdims=True)

    sum_c = lax.fori_loop(0, n, sum_body, jnp.zeros((cblk, 1), jnp.float32))
    mean = sum_c * inv_count                          # (Cblk, 1)

    # ---- Pass 2: biased variance as E[(x - mean)^2] (PyTorch training-mode
    # normalization statistics; two-pass form avoids cancellation).
    def var_body(i, acc):
        d = x_ref[i] - mean
        return acc + jnp.sum(d * d, axis=1, keepdims=True)

    ssq = lax.fori_loop(0, n, var_body, jnp.zeros((cblk, 1), jnp.float32))
    var = ssq * inv_count                             # (Cblk, 1)
    inv_std = lax.rsqrt(var + EPS)                    # (Cblk, 1), EUP

    # ---- Fold BN + mixing into a single per-channel affine:
    #   out = w0*x + w1*(gamma*(x-mean)*inv_std + beta)
    #       = (w0 + w1*gamma*inv_std) * x + w1*(beta - gamma*mean*inv_std)
    w0 = w0_ref[0]
    w1 = w1_ref[0]
    g = gamma_ref[...]                                # (Cblk, 1)
    b = beta_ref[...]                                 # (Cblk, 1)
    g_inv = g * inv_std
    scale = w0 + w1 * g_inv                           # (Cblk, 1)
    bias = w1 * (b - g_inv * mean)                    # (Cblk, 1)

    # ---- Apply: one mul + one add per element, lane-dense stores.
    def apply_body(i, carry):
        o_ref[i] = x_ref[i] * scale + bias
        return carry

    lax.fori_loop(0, n, apply_body, 0)


def _pick_channel_block(C, N, HW, itemsize=4, per_buffer_budget=8 << 20):
    """Largest channel block whose (N, Cblk, HW) tile fits ~8 MiB per buffer
    while satisfying the TPU block rule (multiple of 8 or the full dim)."""
    row_bytes = N * HW * itemsize
    max_c = max(1, per_buffer_budget // row_bytes)
    if C <= max_c:
        return C                                  # full channel dim is always legal
    blk = (min(C, max_c) // 8) * 8
    while blk >= 8:
        if C % blk == 0:
            return blk
        blk -= 8
    # No clean multiple-of-8 divisor under budget; fall back to the full dim.
    return C


def adaptive_norm(x_nchw, w0, w1, gamma, beta):
    """AdaptiveNorm forward.

    x_nchw: (N, C, H, W) f32;  w0, w1: (1,) f32;  gamma, beta: (C,) f32.
    Returns (N, C, H, W) f32.
    """
    N, C, H, W = x_nchw.shape
    HW = H * W

    x_r = x_nchw.reshape(N, C, HW)                    # free reshape, no transpose
    gamma_r = gamma.reshape(C, 1).astype(jnp.float32)
    beta_r = beta.reshape(C, 1).astype(jnp.float32)
    w0 = jnp.asarray(w0, jnp.float32).reshape(1)
    w1 = jnp.asarray(w1, jnp.float32).reshape(1)

    cblk = _pick_channel_block(C, N, HW)
    grid = (C // cblk,)

    # Input + output tiles, double-buffered, plus params/scratch slack.
    block_bytes = N * cblk * HW * 4
    vmem_bytes = min(max(4 * block_bytes + (1 << 20), 4 << 20), 100 << 20)

    out_r = pl.pallas_call(
        _adaptive_norm_kernel,
        out_shape=jax.ShapeDtypeStruct((N, C, HW), jnp.float32),
        grid=grid,
        in_specs=[
            pl.BlockSpec(memory_space=pltpu.MemorySpace.SMEM),   # w0 (scalar)
            pl.BlockSpec(memory_space=pltpu.MemorySpace.SMEM),   # w1 (scalar)
            pl.BlockSpec((cblk, 1), lambda c: (c, 0)),           # gamma
            pl.BlockSpec((cblk, 1), lambda c: (c, 0)),           # beta
            pl.BlockSpec((N, cblk, HW), lambda c: (0, c, 0)),    # x
        ],
        out_specs=pl.BlockSpec((N, cblk, HW), lambda c: (0, c, 0)),
        compiler_params=pltpu.CompilerParams(
            dimension_semantics=("parallel",),
            vmem_limit_bytes=vmem_bytes,
        ),
    )(w0, w1, gamma_r, beta_r, x_r)

    return out_r.reshape(N, C, H, W)


def adaptive_norm_ref(x_nchw, w0, w1, gamma, beta):
    """Pure-JAX reference matching PyTorch training-mode BatchNorm2d."""
    mean = jnp.mean(x_nchw, axis=(0, 2, 3), keepdims=True)
    var = jnp.mean((x_nchw - mean) ** 2, axis=(0, 2, 3), keepdims=True)
    g = gamma.reshape(1, -1, 1, 1)
    b = beta.reshape(1, -1, 1, 1)
    bn = g * (x_nchw - mean) / jnp.sqrt(var + EPS) + b
    return w0[0] * x_nchw + w1[0] * bn


if __name__ == "__main__":
    key = jax.random.PRNGKey(0)
    kx, kg, kb = jax.random.split(key, 3)
    N, C, H, W = 2, 4, 16, 16
    x = jax.random.normal(kx, (N, C, H, W), dtype=jnp.float32)

    # Parameters per AdaptiveNorm.__init__: w_0=1, w_1=0, bn weight=1, bias=0.
    w0 = jnp.array([1.0], dtype=jnp.float32)
    w1 = jnp.array([0.0], dtype=jnp.float32)
    gamma = jnp.ones((C,), dtype=jnp.float32)
    beta = jnp.zeros((C,), dtype=jnp.float32)

    out = jax.block_until_ready(adaptive_norm(x, w0, w1, gamma, beta))
    ref = adaptive_norm_ref(x, w0, w1, gamma, beta)
    assert jnp.allclose(out, ref, atol=1e-5, rtol=1e-5)

    # Non-trivial mixing weights + affine params so the BN path is exercised.
    w0b = jnp.array([0.7], dtype=jnp.float32)
    w1b = jnp.array([0.3], dtype=jnp.float32)
    gamma2 = jax.random.normal(kg, (C,), dtype=jnp.float32)
    beta2 = jax.random.normal(kb, (C,), dtype=jnp.float32)
    out2 = jax.block_until_ready(adaptive_norm(x, w0b, w1b, gamma2, beta2))
    ref2 = adaptive_norm_ref(x, w0b, w1b, gamma2, beta2)
    assert jnp.allclose(out2, ref2, atol=1e-5, rtol=1e-5)

    print("KERNEL_OK")
</pallas_src>

<mosaic_0001>
module attributes {stable_mosaic.version = 11 : i64} {
  func.func @_adaptive_norm_kernel(%arg0: i32, %arg1: memref<1xf32, #tpu.memory_space<smem>>, %arg2: memref<1xf32, #tpu.memory_space<smem>>, %arg3: memref<4x1xf32, #tpu.memory_space<vmem>>, %arg4: memref<4x1xf32, #tpu.memory_space<vmem>>, %arg5: memref<2x4x256xf32, #tpu.memory_space<vmem>>, %arg6: memref<2x4x256xf32, #tpu.memory_space<vmem>>) attributes {dimension_semantics = [#tpu.dimension_semantics<parallel>], iteration_bounds = array<i64: 1>, scalar_prefetch = 0 : i64, scratch_operands = 0 : i64, tpu.core_type = #tpu.core_type<tc>, window_params = [{transform_indices = @transform_0, window_bounds = array<i64: 1>}, {transform_indices = @transform_1, window_bounds = array<i64: 1>}, {transform_indices = @transform_2, window_bounds = array<i64: 4, 1>}, {transform_indices = @transform_3, window_bounds = array<i64: 4, 1>}, {transform_indices = @transform_4, window_bounds = array<i64: 2, 4, 256>}, {transform_indices = @transform_5, window_bounds = array<i64: 2, 4, 256>}]} {
    %cst = arith.constant 0.000000e+00 : f32
    %0 = vector.broadcast %cst : f32 to vector<4x1xf32>
    %c0_i32 = arith.constant 0 : i32
    %c2_i32 = arith.constant 2 : i32
    %1 = arith.addi %c0_i32, %c2_i32 : i32
    %c1_i32 = arith.constant 1 : i32
    %2 = scf.for %arg7 = %c0_i32 to %1 step %c1_i32 iter_args(%arg8 = %0) -> (vector<4x1xf32>)  : i32 {
      %27 = arith.index_cast %arg7 : i32 to index
      %c0_18 = arith.constant 0 : index
      %c0_19 = arith.constant 0 : index
      %28 = vector.load %arg5[%27, %c0_18, %c0_19] : memref<2x4x256xf32, #tpu.memory_space<vmem>>, vector<1x4x256xf32>
      %29 = vector.shape_cast %28 : vector<1x4x256xf32> to vector<4x256xf32>
      %cst_20 = arith.constant dense<0.000000e+00> : vector<4xf32>
      %30 = vector.multi_reduction <add>, %29, %cst_20 [1] : vector<4x256xf32> to vector<4xf32>
      %31 = vector.shape_cast %30 : vector<4xf32> to vector<4x1xf32>
      %32 = arith.addf %arg8, %31 : vector<4x1xf32>
      scf.yield %32 : vector<4x1xf32>
    }
    %c2_i32_0 = arith.constant 2 : i32
    %cst_1 = arith.constant 0.001953125 : f32
    %3 = vector.broadcast %cst_1 : f32 to vector<4x1xf32>
    %4 = arith.mulf %2, %3 : vector<4x1xf32>
    %cst_2 = arith.constant 0.000000e+00 : f32
    %5 = vector.broadcast %cst_2 : f32 to vector<4x1xf32>
    %c0_i32_3 = arith.constant 0 : i32
    %c2_i32_4 = arith.constant 2 : i32
    %6 = arith.addi %c0_i32_3, %c2_i32_4 : i32
    %c1_i32_5 = arith.constant 1 : i32
    %7 = scf.for %arg7 = %c0_i32_3 to %6 step %c1_i32_5 iter_args(%arg8 = %5) -> (vector<4x1xf32>)  : i32 {
      %27 = arith.index_cast %arg7 : i32 to index
      %c0_18 = arith.constant 0 : index
      %c0_19 = arith.constant 0 : index
      %28 = vector.load %arg5[%27, %c0_18, %c0_19] : memref<2x4x256xf32, #tpu.memory_space<vmem>>, vector<1x4x256xf32>
      %29 = vector.shape_cast %28 : vector<1x4x256xf32> to vector<4x256xf32>
      %30 = vector.broadcast %4 : vector<4x1xf32> to vector<4x256xf32>
      %31 = arith.subf %29, %30 : vector<4x256xf32>
      %32 = arith.mulf %31, %31 : vector<4x256xf32>
      %cst_20 = arith.constant dense<0.000000e+00> : vector<4xf32>
      %33 = vector.multi_reduction <add>, %32, %cst_20 [1] : vector<4x256xf32> to vector<4xf32>
      %34 = vector.shape_cast %33 : vector<4xf32> to vector<4x1xf32>
      %35 = arith.addf %arg8, %34 : vector<4x1xf32>
      scf.yield %35 : vector<4x1xf32>
    }
    %c2_i32_6 = arith.constant 2 : i32
    %cst_7 = arith.constant 0.001953125 : f32
    %8 = vector.broadcast %cst_7 : f32 to vector<4x1xf32>
    %9 = arith.mulf %7, %8 : vector<4x1xf32>
    %cst_8 = arith.constant 1.000000e-03 : f32
    %10 = vector.broadcast %cst_8 : f32 to vector<4x1xf32>
    %11 = arith.addf %9, %10 : vector<4x1xf32>
    %12 = math.rsqrt %11 : vector<4x1xf32>
    %c0 = arith.constant 0 : index
    %13 = memref.load %arg1[%c0] : memref<1xf32, #tpu.memory_space<smem>>
    %c0_9 = arith.constant 0 : index
    %14 = memref.load %arg2[%c0_9] : memref<1xf32, #tpu.memory_space<smem>>
    %c0_10 = arith.constant 0 : index
    %c0_11 = arith.constant 0 : index
    %15 = vector.load %arg3[%c0_10, %c0_11] : memref<4x1xf32, #tpu.memory_space<vmem>>, vector<4x1xf32>
    %c0_12 = arith.constant 0 : index
    %c0_13 = arith.constant 0 : index
    %16 = vector.load %arg4[%c0_12, %c0_13] : memref<4x1xf32, #tpu.memory_space<vmem>>, vector<4x1xf32>
    %17 = arith.mulf %15, %12 : vector<4x1xf32>
    %18 = vector.broadcast %14 : f32 to vector<4x1xf32>
    %19 = arith.mulf %18, %17 : vector<4x1xf32>
    %20 = vector.broadcast %13 : f32 to vector<4x1xf32>
    %21 = arith.addf %20, %19 : vector<4x1xf32>
    %22 = arith.mulf %17, %4 : vector<4x1xf32>
    %23 = arith.subf %16, %22 : vector<4x1xf32>
    %24 = vector.broadcast %14 : f32 to vector<4x1xf32>
    %25 = arith.mulf %24, %23 : vector<4x1xf32>
    %c0_i32_14 = arith.constant 0 : i32
    %c2_i32_15 = arith.constant 2 : i32
    %26 = arith.addi %c0_i32_14, %c2_i32_15 : i32
    %c1_i32_16 = arith.constant 1 : i32
    scf.for %arg7 = %c0_i32_14 to %26 step %c1_i32_16  : i32 {
      %27 = arith.index_cast %arg7 : i32 to index
      %c0_18 = arith.constant 0 : index
      %c0_19 = arith.constant 0 : index
      %28 = vector.load %arg5[%27, %c0_18, %c0_19] : memref<2x4x256xf32, #tpu.memory_space<vmem>>, vector<1x4x256xf32>
      %29 = vector.shape_cast %28 : vector<1x4x256xf32> to vector<4x256xf32>
      %30 = vector.broadcast %21 : vector<4x1xf32> to vector<4x256xf32>
      %31 = arith.mulf %29, %30 : vector<4x256xf32>
      %32 = vector.broadcast %25 : vector<4x1xf32> to vector<4x256xf32>
      %33 = arith.addf %31, %32 : vector<4x256xf32>
      %34 = arith.index_cast %arg7 : i32 to index
      %c0_20 = arith.constant 0 : index
      %c0_21 = arith.constant 0 : index
      %35 = vector.load %arg6[%34, %c0_20, %c0_21] : memref<2x4x256xf32, #tpu.memory_space<vmem>>, vector<1x4x256xf32>
      %36 = vector.shape_cast %35 : vector<1x4x256xf32> to vector<4x256xf32>
      %37 = vector.shape_cast %33 : vector<4x256xf32> to vector<1x4x256xf32>
      tpu.vector_store %arg6[%34, %c0_20, %c0_21], %37 {strides = array<i32>} : memref<2x4x256xf32, #tpu.memory_space<vmem>>, vector<1x4x256xf32>,
    }
    %c2_i32_17 = arith.constant 2 : i32
    return
  }
  func.func @transform_0(%arg0: i32) -> i32 {
    %c0_i32 = arith.constant 0 : i32
    %c0_i32_0 = arith.constant 0 : i32
    return %c0_i32 : i32
  }
  func.func @transform_1(%arg0: i32) -> i32 {
    %c0_i32 = arith.constant 0 : i32
    %c0_i32_0 = arith.constant 0 : i32
    return %c0_i32 : i32
  }
  func.func @transform_2(%arg0: i32) -> (i32, i32) {
    %c0_i32 = arith.constant 0 : i32
    %c0_i32_0 = arith.constant 0 : i32
    return %arg0, %c0_i32 : i32, i32
  }
  func.func @transform_3(%arg0: i32) -> (i32, i32) {
    %c0_i32 = arith.constant 0 : i32
    %c0_i32_0 = arith.constant 0 : i32
    return %arg0, %c0_i32 : i32, i32
  }
  func.func @transform_4(%arg0: i32) -> (i32, i32, i32) {
    %c0_i32 = arith.constant 0 : i32
    %c0_i32_0 = arith.constant 0 : i32
    %c0_i32_1 = arith.constant 0 : i32
    return %c0_i32, %arg0, %c0_i32_0 : i32, i32, i32
  }
  func.func @transform_5(%arg0: i32) -> (i32, i32, i32) {
    %c0_i32 = arith.constant 0 : i32
    %c0_i32_0 = arith.constant 0 : i32
    %c0_i32_1 = arith.constant 0 : i32
    return %c0_i32, %arg0, %c0_i32_0 : i32, i32, i32
  }
}

</mosaic_0001>

<llo_original>
// kernel: tpu_custom_call.1
$region0: #{tpu_custom_call.1}
  #allocation0 [shape = 'u32[]', space=smem, size = 0x4, offset = 0x4, fixed_abs, tag = 'smem constant byte address 0x4 - core index']
  #allocation1 [shape = 'u32[144,128]{1,0:T(1,128)}', space=vmem, size = 0x12000, scoped, tag = 'internal scratch']
  #allocation2 [shape = 'f32[1]{0:T(128)S(6)}', space=smem, size = 0x200, scoped, tag = 'scoped memory for tpu_custom_call.1']
  #allocation3 [shape = 'f32[1]{0:T(128)S(6)}', space=smem, size = 0x200, scoped, tag = 'scoped memory for tpu_custom_call.1']
  %s0 = inlined_call_operand.<no memory space> [shape: f32[1], index: 0, kind: input, shape index: {}]
  %s1 = inlined_call_operand.<no memory space> [shape: f32[1], index: 1, kind: input, shape index: {}]
  %s2 = inlined_call_operand.vmem [shape: f32[4,1], index: 2, kind: input, shape index: {}]
  %s3 = inlined_call_operand.vmem [shape: f32[4,1], index: 3, kind: input, shape index: {}]
  %s4 = inlined_call_operand.vmem [shape: f32[2,4,256], index: 4, kind: input, shape index: {}]
  %s5 = inlined_call_operand.hbm [shape: f32[2,4,256], index: 5, kind: output, shape index: {}]
  %s6 = sld [smem:[#allocation0]]
  $region51: #{tpu_custom_call.1} parent=0
    _
  %s8 = ssub.s32 1, %s6
  %s9 = scalar_select 0, %s8, %s6
  %10 = sst [smem:[#allocation2]] %s0
  %11 = sst [smem:[#allocation3]] %s1
  $region1: #{tpu_custom_call.1} parent=0
    #allocation4 [shape = 'u8[8192]{0}', space=vmem, size = 0x2000, scoped, tag = 'output window, operand 0, single buffered']
    #allocation5 [shape = 's32[1]{0}', space=sflag, size = 0x4, scoped, tag = 'scoped memory for tpu_custom_call.1']
    %12 = vsyncpa [#allocation5], 0
    // Predicated region
    $region2: #{tpu_custom_call.1} parent=1 // pred_check
      _
    $region3: #{tpu_custom_call.1} parent=1 // pred_check_branch
      %14 = sbr.rel (0) target = $region5
    $region4: #{tpu_custom_call.1} parent=1 // pred_region
      _
    $region5: #{tpu_custom_call.1} parent=1 // pred_fallthru
      _
    // Predicated region
    $region6: #{tpu_custom_call.1} parent=1 // pred_check
      _
    $region7: #{tpu_custom_call.1} parent=1 // pred_check_branch
      %16 = sbr.rel (0) target = $region9
    $region8: #{tpu_custom_call.1} parent=1 // pred_region
      _
    $region9: #{tpu_custom_call.1} parent=1 // pred_fallthru
      _
    // Predicated region
    $region10: #{tpu_custom_call.1} parent=1 // pred_check
      _
    $region11: #{tpu_custom_call.1} parent=1 // pred_check_branch
      %18 = sbr.rel (0) target = $region13
    $region12: #{tpu_custom_call.1} parent=1 // pred_region
      _
    $region13: #{tpu_custom_call.1} parent=1 // pred_fallthru
      _
    // Predicated region
    $region14: #{tpu_custom_call.1} parent=1 // pred_check
      _
    $region15: #{tpu_custom_call.1} parent=1 // pred_check_branch
      %20 = sbr.rel (0) target = $region17
    $region16: #{tpu_custom_call.1} parent=1 // pred_region
      _
    $region17: #{tpu_custom_call.1} parent=1 // pred_fallthru
      _
    // Predicated region
    $region18: #{tpu_custom_call.1} parent=1 // pred_check
      _
    $region19: #{tpu_custom_call.1} parent=1 // pred_check_branch
      %22 = sbr.rel (0) target = $region21
    $region20: #{tpu_custom_call.1} parent=1 // pred_region
      _
    $region21: #{tpu_custom_call.1} parent=1 // pred_fallthru
      _
    loop: start=0, step=1, limit=2
    $region22: #{tpu_custom_call.1} parent=1 // loop_pre_header
      _
    $region23: #{tpu_custom_call.1} parent=1 // loop_header
      %s24 = sphi 0, %s28
      %p25 = scmp.ge.s32.totalorder %s24, 2
      %v29 = vphi 0.0, %v43
    $region24: #{tpu_custom_call.1} parent=1 // loop_header_branch
      %27 = sbr.rel (%p25) target = $region28
    $region25: #{tpu_custom_call.1} parent=1 // loop_body
      %s30 = smul.u32 %s24, 2
      %s31 = smul.addr %s30, 4
      %s32 = scalar_lea.vmem %s4, %s31
      %v33 = vld [vmem:[%s32] sm:$0xff]
      %v35 = vcombine.high %v33, %v33
      %vm37 = vcmask 1043456
      %v38 = vsel %vm37, %v33, 0.0
      %v39 = vsel %vm37, %v35, 0.0
      %v40 = vadd.f32 %v38, %v39
      %41 = vadd.xlane.f32.xlu0 %v40
      %v42 = vpop.xlane.xlu0 %41
      %v43 = vadd.f32 %v29, %v42
    $region26: #{tpu_custom_call.1} parent=1 // loop_footer
      %s28 = sadd.s32 1, %s24
    $region27: #{tpu_custom_call.1} parent=1 // loop_footer_branch
      %23 = sbr.rel target = $region23
    $region28: #{tpu_custom_call.1} parent=1 // loop_exit
      _
    %v44 = vmul.f32 %v29, 0.001953125
    loop: start=0, step=1, limit=2
    $region29: #{tpu_custom_call.1} parent=1 // loop_pre_header
      _
    $region30: #{tpu_custom_call.1} parent=1 // loop_header
      %s46 = sphi 0, %s50
      %p47 = scmp.ge.s32.totalorder %s46, 2
      %v51 = vphi 0.0, %v76
    $region31: #{tpu_custom_call.1} parent=1 // loop_header_branch
      %49 = sbr.rel (%p47) target = $region35
    $region32: #{tpu_custom_call.1} parent=1 // loop_body
      %s52 = smul.u32 %s46, 2
      %s53 = smul.addr %s52, 4
      %s54 = scalar_lea.vmem %s4, %s53
      %v55 = vld [vmem:[%s54] sm:$0xff]
      %v58 = vunpack.c.l.s4 839922192
      %v59 = vunpack.c.0.s8 %v58
      %v60 = vlaneseq
      %v61 = vshrl.u32 %v60, 7
      %v62 = vsub.s32 %v59, %v61
      %v63 = vrot.slane %v44, %v62
      %v65 = vsub.f32 %v55, %v63
      %v66 = vmul.f32 %v65, %v65
      %v68 = vcombine.high %v66, %v66
      %vm70 = vcmask 1043456
      %v71 = vsel %vm70, %v66, 0.0
      %v72 = vsel %vm70, %v68, 0.0
      %v73 = vadd.f32 %v71, %v72
      %74 = vadd.xlane.f32.xlu0 %v73
      %v75 = vpop.xlane.xlu0 %74
      %v76 = vadd.f32 %v51, %v75
    $region33: #{tpu_custom_call.1} parent=1 // loop_footer
      %s50 = sadd.s32 1, %s46
    $region34: #{tpu_custom_call.1} parent=1 // loop_footer_branch
      %45 = sbr.rel target = $region30
    $region35: #{tpu_custom_call.1} parent=1 // loop_exit
      _
    %v77 = vmul.f32 %v51, 0.001953125
    %v78 = vadd.f32 %v77, 0.001
    %v79 = vrsqrt.pop %v78
    %s80 = sld [smem:[#allocation2]]
    %s81 = sld [smem:[#allocation3]]
    %v82 = vld [vmem:[%s2] sm:$0xf]
    %v83 = vld [vmem:[%s3] sm:$0xf]
    %v84 = vmul.f32 %v82, %v79
    %v85 = vstv %s81
    %v86 = vmul.f32 %v85, %v84
    %v87 = vstv %s80
    %v88 = vadd.f32 %v87, %v86
    %v89 = vmul.f32 %v84, %v44
    %v90 = vsub.f32 %v83, %v89
    %v91 = vmul.f32 %v85, %v90
    loop: start=0, step=1, limit=2
    $region36: #{tpu_custom_call.1} parent=1 // loop_pre_header
      _
    $region37: #{tpu_custom_call.1} parent=1 // loop_header
      %s93 = sphi 0, %s97
      %p94 = scmp.ge.s32.totalorder %s93, 2
    $region38: #{tpu_custom_call.1} parent=1 // loop_header_branch
      %96 = sbr.rel (%p94) target = $region42
    $region39: #{tpu_custom_call.1} parent=1 // loop_body
      %s98 = smul.u32 %s93, 2
      %s99 = smul.addr %s98, 4
      %s100 = scalar_lea.vmem %s4, %s99
      %v101 = vld [vmem:[%s100] sm:$0xff]
      %103 = vset.pattern.permute.xlu0 0
      %104 = vperm.xlu0 %103, %v88
      %v105 = vpop.permute.xlu0 %104
      %v107 = vunpack.c.l.s4 839922192
      %v108 = vunpack.c.0.s8 %v107
      %v109 = vlaneseq
      %v110 = vshrl.u32 %v109, 7
      %v111 = vsub.s32 %v108, %v110
      %v112 = vrot.slane %v105, %v111
      %v114 = vmul.f32 %v101, %v112
      %116 = vset.pattern.permute.xlu0 0
      %117 = vperm.xlu0 %116, %v91
      %v118 = vpop.permute.xlu0 %117
      %v120 = vunpack.c.l.s4 839922192
      %v121 = vunpack.c.0.s8 %v120
      %v122 = vlaneseq
      %v123 = vshrl.u32 %v122, 7
      %v124 = vsub.s32 %v121, %v123
      %v125 = vrot.slane %v118, %v124
      %v127 = vadd.f32 %v114, %v125
      %s128 = smul.addr %s98, 4
      %s129 = scalar_lea.vmem [#allocation4], %s128
      %130 = vst [vmem:[%s129] sm:$0xff] %v127
    $region40: #{tpu_custom_call.1} parent=1 // loop_footer
      %s97 = sadd.s32 1, %s93
    $region41: #{tpu_custom_call.1} parent=1 // loop_footer_branch
      %92 = sbr.rel target = $region37
    $region42: #{tpu_custom_call.1} parent=1 // loop_exit
      _
    // Predicated region
    $region43: #{tpu_custom_call.1} parent=1 // pred_check
      _
    $region44: #{tpu_custom_call.1} parent=1 // pred_check_branch
      %132 = sbr.rel (0) target = $region46
    $region45: #{tpu_custom_call.1} parent=1 // pred_region
      %s134 = ssub.s32 256, 256
      %135 = vsyncadd [#allocation5], %s134
      %s136 = sshll.u32 [#allocation4], 4
      %s137 = int_to_ptr.vmem [resolvable:$true] %s136
      %142 = dma.vmem_to_hbm [thread:$0]  %s137, 256, %s5, [#allocation5], 128, 128, 8
    $region46: #{tpu_custom_call.1} parent=1 // pred_fallthru
      _
    // Predicated region
    $region47: #{tpu_custom_call.1} parent=1 // pred_check
      _
    $region48: #{tpu_custom_call.1} parent=1 // pred_check_branch
      %144 = sbr.rel (0) target = $region50
    $region49: #{tpu_custom_call.1} parent=1 // pred_region
      %145 = dma.done [#allocation5], 256
    $region50: #{tpu_custom_call.1} parent=1 // pred_fallthru
      _
    %146 = vsyncpa [#allocation5], 1

</llo_original>
